<compile_context>
chip_gen: v5e
topology: v5e:2x2
jax: 0.10.0
libtpu: 0.0.40
codegen_flags: <defaults>
</compile_context>

<pallas_src>
import jax
import jax.numpy as jnp
from jax import lax
from jax.experimental import pallas as pl
from jax.experimental.pallas import tpu as pltpu

IN_CHANNELS = 3
OUT_CHANNELS = 16
KSIZE = 3
STRIDE = 2
PADDING = 1
SCALE1 = 0.5
SCALE2 = 1.0


def _fused_conv_pool_kernel(p_ref, w_ref, b_ref, o_ref):
    # p_ref: (1, K, P)   8-tap patches (rows = tap-major, channel-minor; lanes = P)
    # w_ref: (Cout, K)   folded weights (scales / pool-mean / conv layout baked in)
    # b_ref: (Cout, 1)   folded bias (conv bias * scale1 + extra bias, * scale2)
    # o_ref: (1, Cout, P) lane-dense output block (P on lanes)
    acc = jnp.dot(w_ref[...], p_ref[0], preferred_element_type=jnp.float32)  # MXU
    o_ref[0] = (acc + b_ref[...]).astype(o_ref.dtype)


def forward(x, w_t, conv_b, bias, scale1, scale2):
    """x: (N, Cin, D, H, W) f32 NCDHW.  Returns (N, Cout, D-1, H-1, W-1) f32 NCDHW.

    Equivalent to: scale2 * (AvgPool3d(2)(scale1 * ConvTranspose3d(x)) + bias)
    with ConvTranspose3d(in=Cin, out=Cout, k=3, stride=2, pad=1).
    """
    N, Cin, D, H, W = x.shape
    Cout = w_t.shape[1]
    Dp, Hp, Wp = D - 1, H - 1, W - 1          # pooled output extents
    P = Dp * Hp * Wp
    K = 8 * Cin                                # 2x2x2 taps x Cin  (= 24, 8-aligned)

    # ---- trace-time parameter folding (tiny tensors; no per-element runtime cost) ----
    # Fold the 3x3x3 transposed-conv kernel + pool mean into a 2x2x2 kernel:
    #   delta=0 collects k in {1,2};  delta=1 collects k in {0}.
    F = jnp.array([[0.0, 1.0, 1.0],
                   [1.0, 0.0, 0.0]], x.dtype)            # (2 deltas, 3 k-taps)
    wsum = jnp.einsum('ioklm,ak,bl,cm->ioabc', w_t, F, F, F)   # (Cin, Cout, 2, 2, 2)
    s1 = jnp.asarray(scale1, x.dtype)
    s2 = jnp.asarray(scale2, x.dtype)
    w_f = wsum * (s1 * s2 / 8.0)                               # pool mean + both scales
    # (Cout, K) with column order delta-major (dd,dh,dw), channel-minor.
    w_mat = jnp.transpose(w_f, (2, 3, 4, 0, 1)).reshape(K, Cout).T
    b_f = (s2 * (s1 * conv_b + bias.reshape(Cout))).reshape(Cout, 1)

    # ---- glue: 8 shifted crops of the raw input (data layout only, no dilation) ----
    crops = []
    for dd in (0, 1):
        for dh in (0, 1):
            for dw in (0, 1):
                crops.append(x[:, :, dd:dd + Dp, dh:dh + Hp, dw:dw + Wp])
    patches = jnp.stack(crops, axis=1).reshape(N, K, P)        # (N, 24, P)

    # ---- single fused Pallas kernel: conv + pool + bias + scales, one HBM writeback ----
    out = pl.pallas_call(
        _fused_conv_pool_kernel,
        out_shape=jax.ShapeDtypeStruct((N, Cout, P), jnp.float32),
        grid=(N,),
        in_specs=[
            pl.BlockSpec((1, K, P), lambda n: (n, 0, 0)),
            pl.BlockSpec((Cout, K), lambda n: (0, 0)),
            pl.BlockSpec((Cout, 1), lambda n: (0, 0)),
        ],
        out_specs=pl.BlockSpec((1, Cout, P), lambda n: (n, 0, 0)),
        compiler_params=pltpu.CompilerParams(dimension_semantics=("parallel",)),
    )(patches, w_mat, b_f)

    # (N, Cout, P) -> NCDHW is a free reshape (already channel-first).
    return out.reshape(N, Cout, Dp, Hp, Wp)


def _reference(x, w_t, conv_b, bias, scale1, scale2):
    """Pure-JAX reference mirroring the PyTorch module exactly."""
    N, Cin, D, H, W = x.shape
    Cout = w_t.shape[1]
    pp = KSIZE - 1 - PADDING
    w_conv = jnp.flip(w_t, axis=(2, 3, 4)).transpose(1, 0, 2, 3, 4)  # (Cout, Cin, k, k, k)
    conv = lax.conv_general_dilated(
        x, w_conv, window_strides=(1, 1, 1), padding=[(pp, pp)] * 3,
        lhs_dilation=(STRIDE,) * 3,
        dimension_numbers=("NCDHW", "OIDHW", "NCDHW"))
    conv = conv + conv_b[None, :, None, None, None]
    y = conv * scale1
    Do, Ho, Wo = conv.shape[2], conv.shape[3], conv.shape[4]
    Dp, Hp, Wp = Do // 2, Ho // 2, Wo // 2
    yc = y[:, :, :2 * Dp, :2 * Hp, :2 * Wp].reshape(N, Cout, Dp, 2, Hp, 2, Wp, 2)
    pooled = yc.mean(axis=(3, 5, 7))
    return (pooled + bias[None]) * scale2


if __name__ == "__main__":
    key = jax.random.PRNGKey(0)
    k_x, k_w, k_b, k_eb = jax.random.split(key, 4)

    N, D, H, W = 2, 8, 8, 8
    x = jax.random.normal(k_x, (N, IN_CHANNELS, D, H, W), jnp.float32)

    # synthetic parameters with the module's shapes
    w_t = jax.random.normal(k_w, (IN_CHANNELS, OUT_CHANNELS, KSIZE, KSIZE, KSIZE),
                            jnp.float32) * 0.1
    conv_b = jax.random.normal(k_b, (OUT_CHANNELS,), jnp.float32) * 0.1
    extra_bias = jax.random.normal(k_eb, (OUT_CHANNELS, 1, 1, 1), jnp.float32)

    out = jax.jit(forward)(x, w_t, conv_b, extra_bias, SCALE1, SCALE2)
    out = jax.block_until_ready(out)

    ref = _reference(x, w_t, conv_b, extra_bias, SCALE1, SCALE2)
    assert out.shape == ref.shape, (out.shape, ref.shape)
    assert jnp.allclose(out, ref, atol=1e-4, rtol=1e-4), float(jnp.max(jnp.abs(out - ref)))

    print("KERNEL_OK")
</pallas_src>

<mosaic_0001>
module attributes {stable_mosaic.version = 11 : i64} {
  func.func @_fused_conv_pool_kernel(%arg0: i32, %arg1: memref<1x24x343xf32, #tpu.memory_space<vmem>>, %arg2: memref<16x24xf32, #tpu.memory_space<vmem>>, %arg3: memref<16x1xf32, #tpu.memory_space<vmem>>, %arg4: memref<1x16x343xf32, #tpu.memory_space<vmem>>) attributes {dimension_semantics = [#tpu.dimension_semantics<parallel>], iteration_bounds = array<i64: 2>, scalar_prefetch = 0 : i64, scratch_operands = 0 : i64, tpu.core_type = #tpu.core_type<tc>, window_params = [{transform_indices = @transform_0, window_bounds = array<i64: 1, 24, 343>}, {pipeline_mode = #tpu.pipeline_mode<synchronous>, transform_indices = @transform_1, window_bounds = array<i64: 16, 24>}, {pipeline_mode = #tpu.pipeline_mode<synchronous>, transform_indices = @transform_2, window_bounds = array<i64: 16, 1>}, {transform_indices = @transform_3, window_bounds = array<i64: 1, 16, 343>}]} {
    %c0 = arith.constant 0 : index
    %c0_0 = arith.constant 0 : index
    %0 = vector.load %arg2[%c0, %c0_0] : memref<16x24xf32, #tpu.memory_space<vmem>>, vector<16x24xf32>
    %c0_1 = arith.constant 0 : index
    %c0_2 = arith.constant 0 : index
    %c0_3 = arith.constant 0 : index
    %1 = vector.load %arg1[%c0_1, %c0_2, %c0_3] : memref<1x24x343xf32, #tpu.memory_space<vmem>>, vector<1x24x343xf32>
    %2 = vector.shape_cast %1 : vector<1x24x343xf32> to vector<24x343xf32>
    %cst = arith.constant dense<0.000000e+00> : vector<16x343xf32>
    %3 = tpu.matmul %0, %2, %cst {dimension_numbers = #tpu.dot_dimension_numbers<[1], [0], [0], [1], [0, 0, 1, 1], [], []>} : vector<16x24xf32>, vector<24x343xf32>, vector<16x343xf32> -> vector<16x343xf32>
    %c0_4 = arith.constant 0 : index
    %c0_5 = arith.constant 0 : index
    %4 = vector.load %arg3[%c0_4, %c0_5] : memref<16x1xf32, #tpu.memory_space<vmem>>, vector<16x1xf32>
    %5 = vector.broadcast %4 : vector<16x1xf32> to vector<16x343xf32>
    %6 = arith.addf %3, %5 : vector<16x343xf32>
    %c0_6 = arith.constant 0 : index
    %c0_7 = arith.constant 0 : index
    %c0_8 = arith.constant 0 : index
    %7 = vector.load %arg4[%c0_6, %c0_7, %c0_8] : memref<1x16x343xf32, #tpu.memory_space<vmem>>, vector<1x16x343xf32>
    %8 = vector.shape_cast %7 : vector<1x16x343xf32> to vector<16x343xf32>
    %9 = vector.shape_cast %6 : vector<16x343xf32> to vector<1x16x343xf32>
    tpu.vector_store %arg4[%c0_6, %c0_7, %c0_8], %9 {strides = array<i32>} : memref<1x16x343xf32, #tpu.memory_space<vmem>>, vector<1x16x343xf32>,
    return
  }
  func.func @transform_0(%arg0: i32) -> (i32, i32, i32) {
    %c0_i32 = arith.constant 0 : i32
    %c0_i32_0 = arith.constant 0 : i32
    %c0_i32_1 = arith.constant 0 : i32
    return %arg0, %c0_i32, %c0_i32_0 : i32, i32, i32
  }
  func.func @transform_1(%arg0: i32) -> (i32, i32) {
    %c0_i32 = arith.constant 0 : i32
    %c0_i32_0 = arith.constant 0 : i32
    %c0_i32_1 = arith.constant 0 : i32
    return %c0_i32, %c0_i32_0 : i32, i32
  }
  func.func @transform_2(%arg0: i32) -> (i32, i32) {
    %c0_i32 = arith.constant 0 : i32
    %c0_i32_0 = arith.constant 0 : i32
    %c0_i32_1 = arith.constant 0 : i32
    return %c0_i32, %c0_i32_0 : i32, i32
  }
  func.func @transform_3(%arg0: i32) -> (i32, i32, i32) {
    %c0_i32 = arith.constant 0 : i32
    %c0_i32_0 = arith.constant 0 : i32
    %c0_i32_1 = arith.constant 0 : i32
    return %arg0, %c0_i32, %c0_i32_0 : i32, i32, i32
  }
}

</mosaic_0001>

<llo_original>
// kernel: forward.1
$region0: #{forward.1}
  #allocation0 [shape = 'u32[]', space=smem, size = 0x4, offset = 0x4, fixed_abs, tag = 'smem constant byte address 0x4 - core index']
  #allocation1 [shape = 'u32[72,128]{1,0:T(1,128)}', space=vmem, size = 0x9000, scoped, tag = 'internal scratch']
  %s0 = inlined_call_operand.vmem [shape: f32[2,24,343], index: 0, kind: input, shape index: {}]
  %s1 = inlined_call_operand.vmem [shape: f32[16,24], index: 1, kind: input, shape index: {}]
  %s2 = inlined_call_operand.vmem [shape: f32[16,1], index: 2, kind: input, shape index: {}]
  %s3 = inlined_call_operand.vmem [shape: f32[2,16,343], index: 3, kind: output, shape index: {}]
  %s4 = sld [smem:[#allocation0]]
  $region45: #{forward.1} parent=0
    _
  %s6 = ssub.s32 1, %s4
  %s7 = scalar_select 0, %s6, %s4
  loop: start=0, step=1, limit=4
  $region2: #{forward.1} parent=0 // loop_pre_header
    _
  $region3: #{forward.1} parent=0 // loop_header
    %s9 = sphi 0, %s13
    %p10 = scmp.ge.s32.totalorder %s9, 4
    %s19 = sphi 0, %s21
    %s22 = sphi 0, %s19
    %s23 = sphi 0, %s22
    %s39 = sphi 0, %s23
    %s43 = sphi 0, %s43
    %s45 = sphi 0, %s43
    %s46 = sphi 0, %s45
    %s60 = sphi 0, %s46
    %s64 = sphi 0, %s64
    %s66 = sphi 0, %s64
    %s67 = sphi 0, %s66
    %s81 = sphi 0, %s67
    %s87 = sphi 0, %s89
    %s90 = sphi 0, %s87
    %s91 = sphi 0, %s90
    %s107 = sphi 0, %s91
  $region4: #{forward.1} parent=0 // loop_header_branch
    %12 = sbr.rel (%p10) target = $region8
  $region5: #{forward.1} parent=0 // loop_body
    %s14 = ssub.s32 %s9, 1
    %s15 = ssub.s32 %s9, 2
    %s16 = sadd.s32 %s9, 1
    %s17 = ssub.s32 %s9, %s16
    %p18 = scmp.eq.s32.totalorder %s17, 0
    %s20 = sadd.s32 %s19, 1
    %s21 = scalar_select %p18, %s19, %s20
    %p24 = pneg %p18
    %p25 = scmp.eq.s32.totalorder %s9, 1
    %p26 = por %p24, %p25
    %p27 = scmp.ne.s32.totalorder %s19, %s22
    %p28 = scmp.eq.s32.totalorder %s9, 0
    %p29 = por %p27, %p28
    %p30 = scmp.ne.s32.totalorder %s19, %s22
    %p31 = scmp.eq.s32.totalorder %s14, 1
    %p32 = por %p30, %p31
    %p33 = scmp.ne.s32.totalorder %s22, %s23
    %p34 = scmp.eq.s32.totalorder %s14, 0
    %p35 = por %p33, %p34
    %p36 = scmp.ne.s32.totalorder %s22, %s23
    %p37 = scmp.eq.s32.totalorder %s15, 1
    %p38 = por %p36, %p37
    %p40 = scmp.ne.s32.totalorder %s23, %s39
    %p41 = scmp.eq.s32.totalorder %s15, 0
    %p42 = por %p40, %p41
    %s44 = sadd.s32 %s43, 1
    %p47 = scmp.eq.s32.totalorder %s9, 1
    %p48 = scmp.ne.s32.totalorder %s43, %s45
    %p49 = scmp.eq.s32.totalorder %s9, 0
    %p50 = por %p48, %p49
    %p51 = scmp.ne.s32.totalorder %s43, %s45
    %p52 = scmp.eq.s32.totalorder %s14, 1
    %p53 = por %p51, %p52
    %p54 = scmp.ne.s32.totalorder %s45, %s46
    %p55 = scmp.eq.s32.totalorder %s14, 0
    %p56 = por %p54, %p55
    %p57 = scmp.ne.s32.totalorder %s45, %s46
    %p58 = scmp.eq.s32.totalorder %s15, 1
    %p59 = por %p57, %p58
    %p61 = scmp.ne.s32.totalorder %s46, %s60
    %p62 = scmp.eq.s32.totalorder %s15, 0
    %p63 = por %p61, %p62
    %s65 = sadd.s32 %s64, 1
    %p68 = scmp.eq.s32.totalorder %s9, 1
    %p69 = scmp.ne.s32.totalorder %s64, %s66
    %p70 = scmp.eq.s32.totalorder %s9, 0
    %p71 = por %p69, %p70
    %p72 = scmp.ne.s32.totalorder %s64, %s66
    %p73 = scmp.eq.s32.totalorder %s14, 1
    %p74 = por %p72, %p73
    %p75 = scmp.ne.s32.totalorder %s66, %s67
    %p76 = scmp.eq.s32.totalorder %s14, 0
    %p77 = por %p75, %p76
    %p78 = scmp.ne.s32.totalorder %s66, %s67
    %p79 = scmp.eq.s32.totalorder %s15, 1
    %p80 = por %p78, %p79
    %p82 = scmp.ne.s32.totalorder %s67, %s81
    %p83 = scmp.eq.s32.totalorder %s15, 0
    %p84 = por %p82, %p83
    %s85 = ssub.s32 %s9, %s16
    %p86 = scmp.eq.s32.totalorder %s85, 0
    %s88 = sadd.s32 %s87, 1
    %s89 = scalar_select %p86, %s87, %s88
    %p92 = pneg %p86
    %p93 = scmp.eq.s32.totalorder %s9, 1
    %p94 = por %p92, %p93
    %p95 = scmp.ne.s32.totalorder %s87, %s90
    %p96 = scmp.eq.s32.totalorder %s9, 0
    %p97 = por %p95, %p96
    %p98 = scmp.ne.s32.totalorder %s87, %s90
    %p99 = scmp.eq.s32.totalorder %s14, 1
    %p100 = por %p98, %p99
    %p101 = scmp.ne.s32.totalorder %s90, %s91
    %p102 = scmp.eq.s32.totalorder %s14, 0
    %p103 = por %p101, %p102
    %p104 = scmp.ne.s32.totalorder %s90, %s91
    %p105 = scmp.eq.s32.totalorder %s15, 1
    %p106 = por %p104, %p105
    %p108 = scmp.ne.s32.totalorder %s91, %s107
    %p109 = scmp.eq.s32.totalorder %s15, 0
    %p110 = por %p108, %p109
    %p111 = scmp.le.s32.totalorder 1, %s9
    %p112 = scmp.lt.s32.totalorder %s9, 3
    %p113 = pnand %p111, %p112
    %p114 = pneg %p113
    // Predicated region
    $region9: #{forward.1} parent=5 // pred_check
      _
    $region10: #{forward.1} parent=5 // pred_check_branch
      %116 = sbr.rel (%p113) target = $region12
    $region11: #{forward.1} parent=5 // pred_region
      %s117 = ssub.s32 %s9, 1
      // Predicated region
      $region13: #{forward.1} parent=11 // pred_check
        %p118 = pneg %p56
      $region14: #{forward.1} parent=11 // pred_check_branch
        %120 = sbr.rel (%p118) target = $region16
      $region15: #{forward.1} parent=11 // pred_region
        _
      $region16: #{forward.1} parent=11 // pred_fallthru
        _
      // Predicated region
      $region17: #{forward.1} parent=11 // pred_check
        %p121 = pneg %p77
      $region18: #{forward.1} parent=11 // pred_check_branch
        %123 = sbr.rel (%p121) target = $region20
      $region19: #{forward.1} parent=11 // pred_region
        _
      $region20: #{forward.1} parent=11 // pred_fallthru
        _
    $region12: #{forward.1} parent=5 // pred_fallthru
      _
    %p124 = scmp.lt.s32.totalorder %s9, 2
    // Predicated region
    $region21: #{forward.1} parent=5 // pred_check
      %p125 = pneg %p124
    $region22: #{forward.1} parent=5 // pred_check_branch
      %127 = sbr.rel (%p125) target = $region24
    $region23: #{forward.1} parent=5 // pred_region
      // Predicated region
      $region25: #{forward.1} parent=23 // pred_check
        %p128 = pneg %p29
      $region26: #{forward.1} parent=23 // pred_check_branch
        %130 = sbr.rel (%p128) target = $region28
      $region27: #{forward.1} parent=23 // pred_region
        %p131 = scmp.lt.s32.totalorder %s9, 1
        %s132 = scalar_select %p131, %s9, 1
        %s133 = smul.addr %s132, 9
        %s134 = smul.addr %s133, 8
        %s135 = scalar_lea.vmem %s0, %s134
      $region28: #{forward.1} parent=23 // pred_fallthru
        _
    $region24: #{forward.1} parent=5 // pred_fallthru
      _
    %p136 = scmp.le.s32.totalorder 1, %s9
    %p137 = scmp.lt.s32.totalorder %s9, 3
    %p138 = pnand %p136, %p137
    %p139 = pneg %p138
    // Predicated region
    $region29: #{forward.1} parent=5 // pred_check
      _
    $region30: #{forward.1} parent=5 // pred_check_branch
      %141 = sbr.rel (%p138) target = $region32
    $region31: #{forward.1} parent=5 // pred_region
      %s142 = ssub.s32 %s9, 1
      %p143 = scmp.lt.s32.totalorder %s14, 1
      %s144 = scalar_select %p143, %s14, 1
      %s145 = smul.addr %s144, 9
      %s146 = smul.addr %s145, 8
      %s147 = scalar_lea.vmem %s0, %s146
      %p148 = pneg %p35
      %p149 = pneg %p32
      %p150 = pneg %p56
      %p151 = pneg %p53
      %p152 = pneg %p77
      %p153 = pneg %p74
      %p154 = pneg %p103
      %p155 = pneg %p100
      %p156 = scmp.lt.s32.totalorder %s14, 1
      %s157 = scalar_select %p156, %s14, 1
      %s158 = smul.addr %s157, 6
      %s159 = smul.addr %s158, 8
      %s160 = scalar_lea.vmem %s3, %s159
      %p161 = scmp.lt.s32.totalorder %s14, 1
      %s162 = scalar_select %p161, %s14, 1
      %s163 = smul.addr %s162, 9
      %s164 = smul.addr %s163, 8
      %s165 = scalar_lea.vmem %s0, %s164
      %p166 = scmp.lt.s32.totalorder %s14, 1
      %s167 = scalar_select %p166, %s14, 1
      %s168 = smul.addr %s167, 6
      %s169 = smul.addr %s168, 8
      %s170 = scalar_lea.vmem %s3, %s169
      %v171 = vld [vmem:[%s1] sm:$0xff]
      %v172 = vld [vmem:[%s1 + $0x8] sm:$0xff]
      %v173 = vld [vmem:[%s165] sm:$0xff]
      %v174 = vld [vmem:[%s165 + $0x8] sm:$0xff]
      %v175 = vld [vmem:[%s165 + $0x10] sm:$0xff]
      %v176 = vld [vmem:[%s165 + $0x18] sm:$0xff]
      %v177 = vld [vmem:[%s165 + $0x20] sm:$0xff]
      %v178 = vld [vmem:[%s165 + $0x28] sm:$0xff]
      %v179 = vld [vmem:[%s165 + $0x30] sm:$0xff]
      %v180 = vld [vmem:[%s165 + $0x38] sm:$0xff]
      %v181 = vld [vmem:[%s165 + $0x40] sm:$0xff]
      %v182 = vld [vmem:[%s2] sm:$0xff]
      %v183 = vld [vmem:[%s2 + $0x8] sm:$0xff]
      %185 = vset.pattern.permute.xlu0 0
      %186 = vperm.xlu0 %185, %v182
      %v187 = vpop.permute.xlu0 %186
      %190 = vset.pattern.permute.xlu0 0
      %191 = vperm.xlu0 %190, %v183
      %v192 = vpop.permute.xlu0 %191
      %vm194 = vcmask 195584
      %v196 = vsel %vm194, %v171, 0
      %v199 = vsel %vm194, %v172, 0
      %201 = vmatpush.msra.mxu0 0.0
      %202 = vmatpush.msra.mxu0 0.0
      %203 = vmatpush.msra.mxu0 0.0
      %204 = vmatpush.msra.mxu0 0.0
      %205 = vmatpush.msra.mxu0 0.0
      %206 = vmatpush.msra.mxu0 0.0
      %207 = vmatpush.msra.mxu0 0.0
      %208 = vmatpush.msra.mxu0 0.0
      %209 = vmatpush.msra.mxu0 0.0
      %210 = vmatpush.msra.mxu0 0.0
      %211 = vmatpush.msra.mxu0 0.0
      %212 = vmatpush.msra.mxu0 0.0
      %213 = vmatpush.msra.mxu0 0.0
      %214 = vmatpush.msra.mxu0 %v179
      %215 = vmatpush.msra.mxu0 %v176
      %216 = vmatpush.msra.mxu0 %v173
      %217 = vmatmul.f32.gmra.mxu0 %v196
      %v218 = vpop.f32.mrf.mxu0
      %v219 = vadd.f32 %v187, %v218
      %220 = vmatmul.f32.gmra.mxu0 %v199
      %v221 = vpop.f32.mrf.mxu0
      %v222 = vadd.f32 %v192, %v221
      %223 = vdwg.mxu0
      %224 = vmatpush.msra.mxu0 0.0
      %225 = vmatpush.msra.mxu0 0.0
      %226 = vmatpush.msra.mxu0 0.0
      %227 = vmatpush.msra.mxu0 0.0
      %228 = vmatpush.msra.mxu0 0.0
      %229 = vmatpush.msra.mxu0 0.0
      %230 = vmatpush.msra.mxu0 0.0
      %231 = vmatpush.msra.mxu0 0.0
      %232 = vmatpush.msra.mxu0 0.0
      %233 = vmatpush.msra.mxu0 0.0
      %234 = vmatpush.msra.mxu0 0.0
      %235 = vmatpush.msra.mxu0 0.0
      %236 = vmatpush.msra.mxu0 0.0
      %237 = vmatpush.msra.mxu0 %v180
      %238 = vmatpush.msra.mxu0 %v177
      %239 = vmatpush.msra.mxu0 %v174
      %240 = vmatmul.f32.gmra.mxu0 %v196
      %v241 = vpop.f32.mrf.mxu0
      %v242 = vadd.f32 %v187, %v241
      %243 = vmatmul.f32.gmra.mxu0 %v199
      %v244 = vpop.f32.mrf.mxu0
      %v245 = vadd.f32 %v192, %v244
      %246 = vdwg.mxu0
      %247 = vmatpush.msra.mxu0 0.0
      %248 = vmatpush.msra.mxu0 0.0
      %249 = vmatpush.msra.mxu0 0.0
      %250 = vmatpush.msra.mxu0 0.0
      %251 = vmatpush.msra.mxu0 0.0
      %252 = vmatpush.msra.mxu0 0.0
      %253 = vmatpush.msra.mxu0 0.0
      %254 = vmatpush.msra.mxu0 0.0
      %255 = vmatpush.msra.mxu0 0.0
      %256 = vmatpush.msra.mxu0 0.0
      %257 = vmatpush.msra.mxu0 0.0
      %258 = vmatpush.msra.mxu0 0.0
      %259 = vmatpush.msra.mxu0 0.0
      %260 = vmatpush.msra.mxu0 %v181
      %261 = vmatpush.msra.mxu0 %v178
      %262 = vmatpush.msra.mxu0 %v175
      %263 = vmatmul.f32.gmra.mxu0 %v196
      %v264 = vpop.f32.mrf.mxu0
      %v265 = vadd.f32 %v187, %v264
      %266 = vmatmul.f32.gmra.mxu0 %v199
      %v267 = vpop.f32.mrf.mxu0
      %v268 = vadd.f32 %v192, %v267
      %269 = vdwg.mxu0
      %270 = vst [vmem:[%s170] sm:$0xff] %v219
      %271 = vst [vmem:[%s170 + $0x8] sm:$0xff] %v242
      %vm272 = vcmask 711680
      %273 = vst.msk [vmem:[%s170 + $0x10] sm:$0xff] %vm272, %v265
      %274 = vst [vmem:[%s170 + $0x18] sm:$0xff] %v222
      %275 = vst [vmem:[%s170 + $0x20] sm:$0xff] %v245
      %276 = vst.msk [vmem:[%s170 + $0x28] sm:$0xff] %vm272, %v268
      %p277 = scmp.lt.s32.totalorder %s14, 1
      %s278 = scalar_select %p277, %s14, 1
      %s279 = smul.addr %s278, 6
      %s280 = smul.addr %s279, 8
      %s281 = scalar_lea.vmem %s3, %s280
      // Predicated region
      $region33: #{forward.1} parent=31 // pred_check
        %p282 = pneg %p100
      $region34: #{forward.1} parent=31 // pred_check_branch
        %284 = sbr.rel (%p282) target = $region36
      $region35: #{forward.1} parent=31 // pred_region
        _
      $region36: #{forward.1} parent=31 // pred_fallthru
        _
    $region32: #{forward.1} parent=5 // pred_fallthru
      _
    %p285 = scmp.le.s32.totalorder 2, %s9
    // Predicated region
    $region37: #{forward.1} parent=5 // pred_check
      %p286 = pneg %p285
    $region38: #{forward.1} parent=5 // pred_check_branch
      %288 = sbr.rel (%p286) target = $region40
    $region39: #{forward.1} parent=5 // pred_region
      %s289 = ssub.s32 %s9, 2
      // Predicated region
      $region41: #{forward.1} parent=39 // pred_check
        %p290 = pneg %p106
      $region42: #{forward.1} parent=39 // pred_check_branch
        %292 = sbr.rel (%p290) target = $region44
      $region43: #{forward.1} parent=39 // pred_region
        %p293 = scmp.lt.s32.totalorder %s15, 1
        %s294 = scalar_select %p293, %s15, 1
        %s295 = smul.addr %s294, 6
        %s296 = smul.addr %s295, 8
        %s297 = scalar_lea.vmem %s3, %s296
      $region44: #{forward.1} parent=39 // pred_fallthru
        _
    $region40: #{forward.1} parent=5 // pred_fallthru
      _
  $region6: #{forward.1} parent=0 // loop_footer
    %s13 = sadd.s32 1, %s9
  $region7: #{forward.1} parent=0 // loop_footer_branch
    %8 = sbr.rel target = $region3
  $region8: #{forward.1} parent=0 // loop_exit
    _

</llo_original>
